<compile_context>
chip_gen: v7x
topology: tpu7x:2x2x1
jax: 0.10.0
libtpu: 0.0.40
codegen_flags: <defaults>
</compile_context>

<pallas_src>
import jax
import jax.numpy as jnp
from jax.experimental import pallas as pl
from jax.experimental.pallas import tpu as pltpu

MEAN_CH = 24          # first 24 channels = mean, last 24 = variance parameter
_LANE = 128           # TPU lane width
_MAX_TILE = 2048      # spatial tile size (lanes): fits v5e default scoped VMEM
                      # and v7x's 64 MiB with comfortable double-buffering


def _gauss_kernel_tpu_prng(seed_ref, x_ref, o_ref):
    """In-kernel hardware-PRNG path (real TPU backend).

    x_ref block: (1, 2*MEAN_CH, T)   o_ref block: (1, MEAN_CH, T)
    """
    b = pl.program_id(0)
    t = pl.program_id(1)
    # Multi-word seed -> hashed, independent stream per grid block, so both
    # grid axes can safely be marked "parallel" (uses both v7x TensorCores).
    pltpu.prng_seed(seed_ref[0], b, t)

    # Load only the variance half first: keeps vreg pressure low across the
    # transcendental section; the mean half is loaded just before the add.
    v_raw = x_ref[0, MEAN_CH:, :]                        # (24, T)
    # TODO(synk): jnp.expm1 would be nicer numerically near 0, but exp(x)-1
    # matches the reference module exactly and is guaranteed to lower in Mosaic.
    pred_v = jnp.exp(jnp.maximum(v_raw, 0.0)) - 1.0      # exp(relu(x)) - 1

    noise = pltpu.stateful_normal(pred_v.shape, jnp.float32)

    pred_m = x_ref[0, :MEAN_CH, :]                       # (24, T)
    o_ref[0] = (pred_m + pred_v * noise).astype(o_ref.dtype)


def _gauss_kernel_ext_noise(x_ref, n_ref, o_ref):
    """Portable path: standard-normal noise generated outside the kernel."""
    v_raw = x_ref[0, MEAN_CH:, :]                        # (24, T)
    pred_v = jnp.exp(jnp.maximum(v_raw, 0.0)) - 1.0
    pred_m = x_ref[0, :MEAN_CH, :]
    o_ref[0] = (pred_m + pred_v * n_ref[0]).astype(o_ref.dtype)


def gaussian_logit_sampler(x, seed: int = 0):
    """x: [B, 48, H, W] (24 mean + 24 variance channels). Returns [B, 24, H, W]."""
    B, C, H, W = x.shape
    assert C == 2 * MEAN_CH, "expected 24 mean + 24 variance channels"
    HW = H * W

    # Keep the last (lane) dim a multiple of 128 so stores stay unmasked.
    HW_pad = ((HW + _LANE - 1) // _LANE) * _LANE
    T = min(HW_pad, _MAX_TILE)
    n_tiles = pl.cdiv(HW_pad, T)

    x2 = x.reshape(B, C, HW)
    if HW_pad != HW:
        x2 = jnp.pad(x2, ((0, 0), (0, 0), (0, HW_pad - HW)))

    itemsize = jnp.dtype(x.dtype).itemsize
    out_shape = jax.ShapeDtypeStruct((B, MEAN_CH, HW_pad), x.dtype)
    dims = ("parallel", "parallel")   # RNG streams are per-block -> megacore-safe
    cost = pl.CostEstimate(
        flops=4 * B * MEAN_CH * HW_pad,
        transcendentals=2 * B * MEAN_CH * HW_pad,
        bytes_accessed=(C + MEAN_CH) * B * HW_pad * itemsize,
    )

    if jax.default_backend() == "tpu":
        out = pl.pallas_call(
            _gauss_kernel_tpu_prng,
            out_shape=out_shape,
            grid_spec=pltpu.PrefetchScalarGridSpec(
                num_scalar_prefetch=1,
                grid=(B, n_tiles),
                in_specs=[pl.BlockSpec((1, C, T), lambda b, t, seed: (b, 0, t))],
                out_specs=pl.BlockSpec((1, MEAN_CH, T), lambda b, t, seed: (b, 0, t)),
            ),
            compiler_params=pltpu.CompilerParams(dimension_semantics=dims),
            cost_estimate=cost,
        )(jnp.array([seed], dtype=jnp.int32), x2)
    else:
        noise = jax.random.normal(
            jax.random.PRNGKey(seed), (B, MEAN_CH, HW_pad), dtype=x.dtype)
        out = pl.pallas_call(
            _gauss_kernel_ext_noise,
            out_shape=out_shape,
            grid=(B, n_tiles),
            in_specs=[
                pl.BlockSpec((1, C, T), lambda b, t: (b, 0, t)),
                pl.BlockSpec((1, MEAN_CH, T), lambda b, t: (b, 0, t)),
            ],
            out_specs=pl.BlockSpec((1, MEAN_CH, T), lambda b, t: (b, 0, t)),
            compiler_params=pltpu.CompilerParams(dimension_semantics=dims),
            cost_estimate=cost,
        )(x2, noise)

    if HW_pad != HW:
        out = out[:, :, :HW]
    return out.reshape(B, MEAN_CH, H, W)


if __name__ == "__main__":
    key = jax.random.PRNGKey(0)
    # Module slices channels at 24, so input needs 48 channels (24 mean + 24 var).
    B, C, H, W = 2, 2 * MEAN_CH, 16, 16
    x = jax.random.normal(key, (B, C, H, W), dtype=jnp.float32)

    out = jax.block_until_ready(gaussian_logit_sampler(x, seed=0))
    assert out.shape == (B, MEAN_CH, H, W)
    assert out.dtype == jnp.float32
    assert bool(jnp.all(jnp.isfinite(out)))

    # Deterministic check: if the variance channels are all negative then
    # relu -> 0 and exp(0)-1 -> 0, so the output must equal the mean channels.
    x_det = x.at[:, MEAN_CH:, :, :].set(-1.0)
    out_det = jax.block_until_ready(gaussian_logit_sampler(x_det, seed=0))
    assert bool(jnp.allclose(out_det, x_det[:, :MEAN_CH, :, :], atol=1e-6))

    print("KERNEL_OK")
</pallas_src>

<mosaic_0001>
module attributes {stable_mosaic.version = 11 : i64} {
  func.func @_gauss_kernel_ext_noise(%arg0: i32, %arg1: i32, %arg2: memref<1x48x256xf32, #tpu.memory_space<vmem>>, %arg3: memref<1x24x256xf32, #tpu.memory_space<vmem>>, %arg4: memref<1x24x256xf32, #tpu.memory_space<vmem>>) attributes {dimension_semantics = [#tpu.dimension_semantics<parallel>, #tpu.dimension_semantics<parallel>], iteration_bounds = array<i64: 2, 1>, scalar_prefetch = 0 : i64, scratch_operands = 0 : i64, tpu.core_type = #tpu.core_type<tc>, window_params = [{transform_indices = @transform_0, window_bounds = array<i64: 1, 48, 256>}, {transform_indices = @transform_1, window_bounds = array<i64: 1, 24, 256>}, {transform_indices = @transform_2, window_bounds = array<i64: 1, 24, 256>}]} {
    %c0 = arith.constant 0 : index
    %c24 = arith.constant 24 : index
    %c0_0 = arith.constant 0 : index
    %0 = vector.load %arg2[%c0, %c24, %c0_0] : memref<1x48x256xf32, #tpu.memory_space<vmem>>, vector<1x24x256xf32>
    %1 = vector.shape_cast %0 : vector<1x24x256xf32> to vector<24x256xf32>
    %cst = arith.constant 0.000000e+00 : f32
    %2 = vector.broadcast %cst : f32 to vector<24x256xf32>
    %3 = arith.maximumf %1, %2 : vector<24x256xf32>
    %4 = math.exp %3 : vector<24x256xf32>
    %cst_1 = arith.constant 1.000000e+00 : f32
    %5 = vector.broadcast %cst_1 : f32 to vector<24x256xf32>
    %6 = arith.subf %4, %5 : vector<24x256xf32>
    %c0_2 = arith.constant 0 : index
    %c0_3 = arith.constant 0 : index
    %c0_4 = arith.constant 0 : index
    %7 = vector.load %arg2[%c0_2, %c0_3, %c0_4] : memref<1x48x256xf32, #tpu.memory_space<vmem>>, vector<1x24x256xf32>
    %8 = vector.shape_cast %7 : vector<1x24x256xf32> to vector<24x256xf32>
    %c0_5 = arith.constant 0 : index
    %c0_6 = arith.constant 0 : index
    %c0_7 = arith.constant 0 : index
    %9 = vector.load %arg3[%c0_5, %c0_6, %c0_7] : memref<1x24x256xf32, #tpu.memory_space<vmem>>, vector<1x24x256xf32>
    %10 = vector.shape_cast %9 : vector<1x24x256xf32> to vector<24x256xf32>
    %11 = arith.mulf %6, %10 : vector<24x256xf32>
    %12 = arith.addf %8, %11 : vector<24x256xf32>
    %c0_8 = arith.constant 0 : index
    %c0_9 = arith.constant 0 : index
    %c0_10 = arith.constant 0 : index
    %13 = vector.load %arg4[%c0_8, %c0_9, %c0_10] : memref<1x24x256xf32, #tpu.memory_space<vmem>>, vector<1x24x256xf32>
    %14 = vector.shape_cast %13 : vector<1x24x256xf32> to vector<24x256xf32>
    %15 = vector.shape_cast %12 : vector<24x256xf32> to vector<1x24x256xf32>
    tpu.vector_store %arg4[%c0_8, %c0_9, %c0_10], %15 {strides = array<i32>} : memref<1x24x256xf32, #tpu.memory_space<vmem>>, vector<1x24x256xf32>,
    return
  }
  func.func @transform_0(%arg0: i32, %arg1: i32) -> (i32, i32, i32) {
    %c0_i32 = arith.constant 0 : i32
    %c0_i32_0 = arith.constant 0 : i32
    return %arg0, %c0_i32, %arg1 : i32, i32, i32
  }
  func.func @transform_1(%arg0: i32, %arg1: i32) -> (i32, i32, i32) {
    %c0_i32 = arith.constant 0 : i32
    %c0_i32_0 = arith.constant 0 : i32
    return %arg0, %c0_i32, %arg1 : i32, i32, i32
  }
  func.func @transform_2(%arg0: i32, %arg1: i32) -> (i32, i32, i32) {
    %c0_i32 = arith.constant 0 : i32
    %c0_i32_0 = arith.constant 0 : i32
    return %arg0, %c0_i32, %arg1 : i32, i32, i32
  }
}

</mosaic_0001>

<llo_original>
// kernel: tpu_custom_call.1
$region0: #{tpu_custom_call.1}
  #allocation0 [shape = 'u32[]', space=smem, size = 0x4, offset = 0x4, fixed_abs, tag = 'smem constant byte address 0x4 - core index']
  #allocation1 [shape = 'u32[144,128]{1,0:T(1,128)}', space=vmem, size = 0x12000, scoped, tag = 'internal scratch']
  %s0 = inlined_call_operand.hbm [shape: f32[2,48,256], index: 0, kind: input, shape index: {}]
  %s1 = inlined_call_operand.hbm [shape: f32[2,24,256], index: 1, kind: input, shape index: {}]
  %s2 = inlined_call_operand.hbm [shape: f32[2,24,256], index: 2, kind: output, shape index: {}]
  %s3 = sld [smem:[#allocation0]]
  $region49: #{tpu_custom_call.1} parent=0
    _
  %s5 = ssub.s32 1, %s3
  %s6 = scalar_select 0, %s5, %s3
  $region1: #{tpu_custom_call.1} parent=0
    #allocation2 [shape = 'u8[98304]{0}', space=vmem, size = 0x18000, scoped, tag = 'input window, operand 0']
    #allocation3 [shape = 's32[2]{0}', space=sflag, size = 0x8, scoped, tag = 'scoped memory for tpu_custom_call.1']
    #allocation4 [shape = 's32[2]{0}', space=sflag, size = 0x8, scoped, tag = 'scoped memory for tpu_custom_call.1']
    #allocation5 [shape = 'u8[49152]{0}', space=vmem, size = 0xc000, scoped, tag = 'input window, operand 1']
    #allocation6 [shape = 's32[2]{0}', space=sflag, size = 0x8, scoped, tag = 'scoped memory for tpu_custom_call.1']
    #allocation7 [shape = 'u8[49152]{0}', space=vmem, size = 0xc000, scoped, tag = 'output window, operand 0']
    %7 = vsyncpa [#allocation3], 0
    %s8 = scalar_lea.sflag [#allocation3], 1
    %9 = vsyncpa %s8, 0
    %10 = vsyncpa [#allocation6], 0
    %s11 = scalar_lea.sflag [#allocation6], 1
    %12 = vsyncpa %s11, 0
    %13 = vsyncpa [#allocation4], 0
    %s14 = scalar_lea.sflag [#allocation4], 1
    %15 = vsyncpa %s14, 0
    loop: start=0, step=1, limit=4
    $region2: #{tpu_custom_call.1} parent=1 // loop_pre_header
      _
    $region3: #{tpu_custom_call.1} parent=1 // loop_header
      %s17 = sphi 0, %s21
      %p18 = scmp.ge.s32.totalorder %s17, 4
      %s24 = sphi 0, %s36
      %s25 = sphi 0, %s32
      %s26 = sphi 0, %s24
      %s27 = sphi 0, %s25
      %s28 = sphi 0, %s26
      %s29 = sphi 0, %s27
      %s41 = sphi 0, %s43
      %s44 = sphi 0, %s41
      %s45 = sphi 0, %s44
      %s61 = sphi 0, %s45
      %s69 = sphi 0, %s71
      %s72 = sphi 0, %s69
      %s73 = sphi 0, %s72
      %s89 = sphi 0, %s73
      %s97 = sphi 0, %s99
      %s100 = sphi 0, %s97
      %s101 = sphi 0, %s100
      %s117 = sphi 0, %s101
    $region4: #{tpu_custom_call.1} parent=1 // loop_header_branch
      %20 = sbr.rel (%p18) target = $region8
    $region5: #{tpu_custom_call.1} parent=1 // loop_body
      %s22 = ssub.s32 %s17, 1
      %s23 = ssub.s32 %s17, 2
      %s30 = sadd.s32 1, %s25
      %p31 = scmp.ge.s32.totalorder %s30, 1
      %s32 = scalar_select %p31, 0, %s30
      %s33 = sadd.s32 1, %s24
      %s34 = scalar_select %p31, %s33, %s24
      %p35 = scmp.ge.s32.totalorder %s34, 2
      %s36 = scalar_select %p35, 0, %s34
      %s37 = ssub.s32 %s24, %s36
      %s38 = ssub.s32 %s25, %s32
      %s39 = sor.u32 %s37, %s38
      %p40 = scmp.eq.s32.totalorder %s39, 0
      %s42 = sadd.s32 %s41, 1
      %s43 = scalar_select %p40, %s41, %s42
      %p46 = pneg %p40
      %p47 = scmp.eq.s32.totalorder %s17, 1
      %p48 = por %p46, %p47
      %p49 = scmp.ne.s32.totalorder %s41, %s44
      %p50 = scmp.eq.s32.totalorder %s17, 0
      %p51 = por %p49, %p50
      %p52 = scmp.ne.s32.totalorder %s41, %s44
      %p53 = scmp.eq.s32.totalorder %s22, 1
      %p54 = por %p52, %p53
      %p55 = scmp.ne.s32.totalorder %s44, %s45
      %p56 = scmp.eq.s32.totalorder %s22, 0
      %p57 = por %p55, %p56
      %p58 = scmp.ne.s32.totalorder %s44, %s45
      %p59 = scmp.eq.s32.totalorder %s23, 1
      %p60 = por %p58, %p59
      %p62 = scmp.ne.s32.totalorder %s45, %s61
      %p63 = scmp.eq.s32.totalorder %s23, 0
      %p64 = por %p62, %p63
      %s65 = ssub.s32 %s24, %s36
      %s66 = ssub.s32 %s25, %s32
      %s67 = sor.u32 %s65, %s66
      %p68 = scmp.eq.s32.totalorder %s67, 0
      %s70 = sadd.s32 %s69, 1
      %s71 = scalar_select %p68, %s69, %s70
      %p74 = pneg %p68
      %p75 = scmp.eq.s32.totalorder %s17, 1
      %p76 = por %p74, %p75
      %p77 = scmp.ne.s32.totalorder %s69, %s72
      %p78 = scmp.eq.s32.totalorder %s17, 0
      %p79 = por %p77, %p78
      %p80 = scmp.ne.s32.totalorder %s69, %s72
      %p81 = scmp.eq.s32.totalorder %s22, 1
      %p82 = por %p80, %p81
      %p83 = scmp.ne.s32.totalorder %s72, %s73
      %p84 = scmp.eq.s32.totalorder %s22, 0
      %p85 = por %p83, %p84
      %p86 = scmp.ne.s32.totalorder %s72, %s73
      %p87 = scmp.eq.s32.totalorder %s23, 1
      %p88 = por %p86, %p87
      %p90 = scmp.ne.s32.totalorder %s73, %s89
      %p91 = scmp.eq.s32.totalorder %s23, 0
      %p92 = por %p90, %p91
      %s93 = ssub.s32 %s24, %s36
      %s94 = ssub.s32 %s25, %s32
      %s95 = sor.u32 %s93, %s94
      %p96 = scmp.eq.s32.totalorder %s95, 0
      %s98 = sadd.s32 %s97, 1
      %s99 = scalar_select %p96, %s97, %s98
      %p102 = pneg %p96
      %p103 = scmp.eq.s32.totalorder %s17, 1
      %p104 = por %p102, %p103
      %p105 = scmp.ne.s32.totalorder %s97, %s100
      %p106 = scmp.eq.s32.totalorder %s17, 0
      %p107 = por %p105, %p106
      %p108 = scmp.ne.s32.totalorder %s97, %s100
      %p109 = scmp.eq.s32.totalorder %s22, 1
      %p110 = por %p108, %p109
      %p111 = scmp.ne.s32.totalorder %s100, %s101
      %p112 = scmp.eq.s32.totalorder %s22, 0
      %p113 = por %p111, %p112
      %p114 = scmp.ne.s32.totalorder %s100, %s101
      %p115 = scmp.eq.s32.totalorder %s23, 1
      %p116 = por %p114, %p115
      %p118 = scmp.ne.s32.totalorder %s101, %s117
      %p119 = scmp.eq.s32.totalorder %s23, 0
      %p120 = por %p118, %p119
      %p121 = scmp.le.s32.totalorder 1, %s17
      %p122 = scmp.lt.s32.totalorder %s17, 3
      %p123 = pnand %p121, %p122
      %p124 = pneg %p123
      // Predicated region
      $region9: #{tpu_custom_call.1} parent=5 // pred_check
        _
      $region10: #{tpu_custom_call.1} parent=5 // pred_check_branch
        %126 = sbr.rel (%p123) target = $region12
      $region11: #{tpu_custom_call.1} parent=5 // pred_region
        %s127 = ssub.s32 %s17, 1
      $region12: #{tpu_custom_call.1} parent=5 // pred_fallthru
        _
      %p128 = scmp.lt.s32.totalorder %s17, 2
      // Predicated region
      $region13: #{tpu_custom_call.1} parent=5 // pred_check
        %p129 = pneg %p128
      $region14: #{tpu_custom_call.1} parent=5 // pred_check_branch
        %131 = sbr.rel (%p129) target = $region16
      $region15: #{tpu_custom_call.1} parent=5 // pred_region
        // Predicated region
        $region17: #{tpu_custom_call.1} parent=15 // pred_check
          %p132 = pneg %p51
        $region18: #{tpu_custom_call.1} parent=15 // pred_check_branch
          %134 = sbr.rel (%p132) target = $region20
        $region19: #{tpu_custom_call.1} parent=15 // pred_region
          %s135 = sand.u32 %s41, 1
          %s136 = scalar_lea.sflag [#allocation3], %s135
          %s137 = sand.u32 %s41, 1
          %s138 = smul.addr %s137, 96
          %s139 = scalar_lea.vmem [#allocation2], %s138
          %s140 = smul.u32 2, %s25
          %s142 = ssub.s32 1536, 1536
          %143 = vsyncadd %s136, %s142
          %s144 = smul.addr %s24, 12
          %s145 = sadd.s32 %s140, %s144
          %s146 = smul.addr %s145, 128
          %s147 = scalar_lea.hbm %s0, %s146
          %s148 = sshll.u32 %s139, 4
          %s149 = int_to_ptr.vmem [resolvable:$true] %s148
          %154 = dma.hbm_to_vmem [thread:$0]  %s147, 1536, %s149, %s136, 256, 256, 16
        $region20: #{tpu_custom_call.1} parent=15 // pred_fallthru
          _
        // Predicated region
        $region21: #{tpu_custom_call.1} parent=15 // pred_check
          %p155 = pneg %p79
        $region22: #{tpu_custom_call.1} parent=15 // pred_check_branch
          %157 = sbr.rel (%p155) target = $region24
        $region23: #{tpu_custom_call.1} parent=15 // pred_region
          %s158 = sand.u32 %s69, 1
          %s159 = scalar_lea.sflag [#allocation6], %s158
          %s160 = sand.u32 %s69, 1
          %s161 = smul.addr %s160, 48
          %s162 = scalar_lea.vmem [#allocation5], %s161
          %s163 = smul.u32 2, %s25
          %s165 = ssub.s32 768, 768
          %166 = vsyncadd %s159, %s165
          %s167 = smul.addr %s24, 6
          %s168 = sadd.s32 %s163, %s167
          %s169 = smul.addr %s168, 128
          %s170 = scalar_lea.hbm %s1, %s169
          %s171 = sshll.u32 %s162, 4
          %s172 = int_to_ptr.vmem [resolvable:$true] %s171
          %177 = dma.hbm_to_vmem [thread:$0]  %s170, 768, %s172, %s159, 256, 256, 16
        $region24: #{tpu_custom_call.1} parent=15 // pred_fallthru
          _
      $region16: #{tpu_custom_call.1} parent=5 // pred_fallthru
        _
      %p178 = scmp.le.s32.totalorder 1, %s17
      %p179 = scmp.lt.s32.totalorder %s17, 3
      %p180 = pnand %p178, %p179
      %p181 = pneg %p180
      // Predicated region
      $region25: #{tpu_custom_call.1} parent=5 // pred_check
        _
      $region26: #{tpu_custom_call.1} parent=5 // pred_check_branch
        %183 = sbr.rel (%p180) target = $region28
      $region27: #{tpu_custom_call.1} parent=5 // pred_region
        %s184 = ssub.s32 %s17, 1
        %s185 = sand.u32 %s44, 1
        %s186 = scalar_lea.sflag [#allocation3], %s185
        %s187 = sand.u32 %s44, 1
        %s188 = smul.addr %s187, 96
        %s189 = scalar_lea.vmem [#allocation2], %s188
        // Predicated region
        $region29: #{tpu_custom_call.1} parent=27 // pred_check
          %p190 = pneg %p57
        $region30: #{tpu_custom_call.1} parent=27 // pred_check_branch
          %192 = sbr.rel (%p190) target = $region32
        $region31: #{tpu_custom_call.1} parent=27 // pred_region
          %193 = dma.done %s186, 1536
        $region32: #{tpu_custom_call.1} parent=27 // pred_fallthru
          _
        %s194 = sand.u32 %s72, 1
        %s195 = scalar_lea.sflag [#allocation6], %s194
        %s196 = sand.u32 %s72, 1
        %s197 = smul.addr %s196, 48
        %s198 = scalar_lea.vmem [#allocation5], %s197
        // Predicated region
        $region33: #{tpu_custom_call.1} parent=27 // pred_check
          %p199 = pneg %p85
        $region34: #{tpu_custom_call.1} parent=27 // pred_check_branch
          %201 = sbr.rel (%p199) target = $region36
        $region35: #{tpu_custom_call.1} parent=27 // pred_region
          %202 = dma.done %s195, 768
        $region36: #{tpu_custom_call.1} parent=27 // pred_fallthru
          _
        %s203 = sand.u32 %s44, 1
        %s204 = scalar_lea.sflag [#allocation3], %s203
        %s205 = sand.u32 %s44, 1
        %s206 = smul.addr %s205, 96
        %s207 = scalar_lea.vmem [#allocation2], %s206
        %p208 = pneg %p57
        %p209 = pneg %p54
        %s210 = sand.u32 %s72, 1
        %s211 = scalar_lea.sflag [#allocation6], %s210
        %s212 = sand.u32 %s72, 1
        %s213 = smul.addr %s212, 48
        %s214 = scalar_lea.vmem [#allocation5], %s213
        %p215 = pneg %p85
        %p216 = pneg %p82
        %p217 = pneg %p113
        %p218 = pneg %p110
        %s219 = sand.u32 %s100, 1
        %s220 = scalar_lea.sflag [#allocation4], %s219
        %s221 = sand.u32 %s100, 1
        %s222 = smul.addr %s221, 48
        %s223 = scalar_lea.vmem [#allocation7], %s222
        %s224 = smul.u32 2, %s27
        %s225 = smul.u32 2, %s27
        %s226 = smul.u32 2, %s27
        %v227 = vld [vmem:[%s189 + $0x30] sm:$0xff]
        %v228 = vld [vmem:[%s189 + $0x38] sm:$0xff]
        %v229 = vld [vmem:[%s189 + $0x40] sm:$0xff]
        %v230 = vld [vmem:[%s189 + $0x48] sm:$0xff]
        %v231 = vld [vmem:[%s189 + $0x50] sm:$0xff]
        %v232 = vld [vmem:[%s189 + $0x58] sm:$0xff]
        %v233 = vmax.f32 %v227, 0.0
        %v234 = vmax.f32 %v228, 0.0
        %v235 = vmax.f32 %v229, 0.0
        %v236 = vmax.f32 %v230, 0.0
        %v237 = vmax.f32 %v231, 0.0
        %v238 = vmax.f32 %v232, 0.0
        %v239 = vmul.f32 %v233, 1.442695
        %v240 = vpow.pop %v239
        %v241 = vmul.f32 %v234, 1.442695
        %v242 = vpow.pop %v241
        %v243 = vmul.f32 %v235, 1.442695
        %v244 = vpow.pop %v243
        %v245 = vmul.f32 %v236, 1.442695
        %v246 = vpow.pop %v245
        %v247 = vmul.f32 %v237, 1.442695
        %v248 = vpow.pop %v247
        %v249 = vmul.f32 %v238, 1.442695
        %v250 = vpow.pop %v249
        %v251 = vsub.f32 %v240, 1.0
        %v252 = vsub.f32 %v242, 1.0
        %v253 = vsub.f32 %v244, 1.0
        %v254 = vsub.f32 %v246, 1.0
        %v255 = vsub.f32 %v248, 1.0
        %v256 = vsub.f32 %v250, 1.0
        %v257 = vld [vmem:[%s189] sm:$0xff]
        %v258 = vld [vmem:[%s189 + $0x8] sm:$0xff]
        %v259 = vld [vmem:[%s189 + $0x10] sm:$0xff]
        %v260 = vld [vmem:[%s189 + $0x18] sm:$0xff]
        %v261 = vld [vmem:[%s189 + $0x20] sm:$0xff]
        %v262 = vld [vmem:[%s189 + $0x28] sm:$0xff]
        %v263 = vld [vmem:[%s198] sm:$0xff]
        %v264 = vld [vmem:[%s198 + $0x8] sm:$0xff]
        %v265 = vld [vmem:[%s198 + $0x10] sm:$0xff]
        %v266 = vld [vmem:[%s198 + $0x18] sm:$0xff]
        %v267 = vld [vmem:[%s198 + $0x20] sm:$0xff]
        %v268 = vld [vmem:[%s198 + $0x28] sm:$0xff]
        %v269 = vmul.f32 %v251, %v263
        %v270 = vmul.f32 %v252, %v264
        %v271 = vmul.f32 %v253, %v265
        %v272 = vmul.f32 %v254, %v266
        %v273 = vmul.f32 %v255, %v267
        %v274 = vmul.f32 %v256, %v268
        %v275 = vadd.f32 %v257, %v269
        %v276 = vadd.f32 %v258, %v270
        %v277 = vadd.f32 %v259, %v271
        %v278 = vadd.f32 %v260, %v272
        %v279 = vadd.f32 %v261, %v273
        %v280 = vadd.f32 %v262, %v274
        %281 = vst [vmem:[%s223] sm:$0xff] %v275
        %282 = vst [vmem:[%s223 + $0x8] sm:$0xff] %v276
        %283 = vst [vmem:[%s223 + $0x10] sm:$0xff] %v277
        %284 = vst [vmem:[%s223 + $0x18] sm:$0xff] %v278
        %285 = vst [vmem:[%s223 + $0x20] sm:$0xff] %v279
        %286 = vst [vmem:[%s223 + $0x28] sm:$0xff] %v280
        %s287 = sand.u32 %s100, 1
        %s288 = scalar_lea.sflag [#allocation4], %s287
        %s289 = sand.u32 %s100, 1
        %s290 = smul.addr %s289, 48
        %s291 = scalar_lea.vmem [#allocation7], %s290
        // Predicated region
        $region37: #{tpu_custom_call.1} parent=27 // pred_check
          %p292 = pneg %p110
        $region38: #{tpu_custom_call.1} parent=27 // pred_check_branch
          %294 = sbr.rel (%p292) target = $region40
        $region39: #{tpu_custom_call.1} parent=27 // pred_region
          %s295 = smul.u32 2, %s27
          %s297 = ssub.s32 768, 768
          %298 = vsyncadd %s288, %s297
          %s299 = smul.addr %s26, 6
          %s300 = sadd.s32 %s295, %s299
          %s301 = smul.addr %s300, 128
          %s302 = scalar_lea.hbm %s2, %s301
          %s303 = sshll.u32 %s291, 4
          %s304 = int_to_ptr.vmem [resolvable:$true] %s303
          %309 = dma.vmem_to_hbm [thread:$0]  %s304, 768, %s302, %s288, 256, 256, 16
        $region40: #{tpu_custom_call.1} parent=27 // pred_fallthru
          _
      $region28: #{tpu_custom_call.1} parent=5 // pred_fallthru
        _
      %p310 = scmp.le.s32.totalorder 2, %s17
      // Predicated region
      $region41: #{tpu_custom_call.1} parent=5 // pred_check
        %p311 = pneg %p310
      $region42: #{tpu_custom_call.1} parent=5 // pred_check_branch
        %313 = sbr.rel (%p311) target = $region44
      $region43: #{tpu_custom_call.1} parent=5 // pred_region
        %s314 = ssub.s32 %s17, 2
        // Predicated region
        $region45: #{tpu_custom_call.1} parent=43 // pred_check
          %p315 = pneg %p116
        $region46: #{tpu_custom_call.1} parent=43 // pred_check_branch
          %317 = sbr.rel (%p315) target = $region48
        $region47: #{tpu_custom_call.1} parent=43 // pred_region
          %s318 = sand.u32 %s101, 1
          %s319 = scalar_lea.sflag [#allocation4], %s318
          %s320 = sand.u32 %s101, 1
          %s321 = smul.addr %s320, 48
          %s322 = scalar_lea.vmem [#allocation7], %s321
          %323 = dma.done %s319, 768
        $region48: #{tpu_custom_call.1} parent=43 // pred_fallthru
          _
      $region44: #{tpu_custom_call.1} parent=5 // pred_fallthru
        _
    $region6: #{tpu_custom_call.1} parent=1 // loop_footer
      %s21 = sadd.s32 1, %s17
    $region7: #{tpu_custom_call.1} parent=1 // loop_footer_branch
      %16 = sbr.rel target = $region3
    $region8: #{tpu_custom_call.1} parent=1 // loop_exit
      _
    %324 = vsyncpa [#allocation3], 1
    %s325 = scalar_lea.sflag [#allocation3], 1
    %326 = vsyncpa %s325, 1
    %327 = vsyncpa [#allocation6], 1
    %s328 = scalar_lea.sflag [#allocation6], 1
    %329 = vsyncpa %s328, 1
    %330 = vsyncpa [#allocation4], 1
    %s331 = scalar_lea.sflag [#allocation4], 1
    %332 = vsyncpa %s331, 1

</llo_original>
